<compile_context>
chip_gen: v7x
topology: tpu7x:2x2x1
jax: 0.10.0
libtpu: 0.0.40
codegen_flags: <defaults>
</compile_context>

<pallas_src>
import functools

import jax
import jax.numpy as jnp
from jax.experimental import pallas as pl
from jax.experimental.pallas import tpu as pltpu


def _round_up(x, m):
    return ((x + m - 1) // m) * m


def _cdiv(a, b):
    return (a + b - 1) // b


def _lane_tiles(size, max_tile):
    """Tiling for the lane (last) axis: tile is a multiple of 128."""
    if size <= max_tile:
        t = _round_up(size, 128)
        return t, t, 1
    n = _cdiv(size, max_tile)
    t = _round_up(_cdiv(size, n), 128)
    return t, t * n, n


def _row_tiles(size, max_tile, min_align):
    """Tiling for O / K: sublane-granularity padding when a single tile covers the dim,
    128-aligned tiles when the dim must be split (split K is the weight's lane axis)."""
    full = _round_up(size, min_align)
    if full <= max_tile:
        return full, full, 1
    n = _cdiv(size, max_tile)
    t = _round_up(_cdiv(size, n), 128)
    return t, t * n, n


def _mm_bias_kernel(w_ref, x_ref, b_ref, o_ref):
    # Single-K-tile case (the common one for Embedding): one dot, bias added in f32,
    # no accumulator scratch, no init/finalize phases.
    o_ref[...] = (
        jnp.dot(w_ref[...], x_ref[...], preferred_element_type=jnp.float32) + b_ref[...]
    ).astype(o_ref.dtype)


def _make_mm_bias_acc_kernel(k_axis):
    # K-reduction variant (only used when the contraction does not fit one tile).
    def kernel(w_ref, x_ref, b_ref, o_ref, acc_ref):
        k = pl.program_id(k_axis)

        @pl.when(k == 0)
        def _init():
            acc_ref[...] = jnp.zeros_like(acc_ref)

        acc_ref[...] += jnp.dot(
            w_ref[...], x_ref[...], preferred_element_type=jnp.float32
        )

        @pl.when(k == pl.num_programs(k_axis) - 1)
        def _finalize():
            o_ref[...] = (acc_ref[...] + b_ref[...]).astype(o_ref.dtype)

    return kernel


@functools.partial(
    jax.jit,
    static_argnames=("block_o", "block_n", "block_k", "fold_batch_below"),
)
def embedding_forward(
    x, weight, bias, *, block_o=512, block_n=2048, block_k=512, fold_batch_below=128
):
    """x: (B, I, L); weight: (O, I); bias: (O,). Returns (B, O, L) — Conv1d(kernel_size=1)."""
    B, I, L = x.shape
    O = weight.shape[0]
    out_dtype = x.dtype
    itemsize = jnp.dtype(x.dtype).itemsize
    sub = max(8, 32 // itemsize)  # sublane granularity (8 for f32)

    vmem_limit = 32 * 1024 * 1024  # v5e default is 16 MiB; 32 MiB fits every generation.

    # --- contraction (K = input_size) tiling ---
    tk, K_p, grid_k = _row_tiles(I, block_k, sub)
    # --- output-channel (O) tiling ---
    to, O_p, grid_o = _row_tiles(O, block_o, sub)

    w_p = jnp.pad(weight, ((0, O_p - O), (0, K_p - I)))
    b_p = jnp.pad(bias.astype(jnp.float32), (0, O_p - O)).reshape(O_p, 1)

    if L < fold_batch_below:
        # ---------- fold path: tiny L -> fold batch into the lane axis (one dense matmul).
        # Costs two XLA transposes but avoids per-batch lane padding (8 -> 128 etc.).
        N = B * L
        tn, N_p, grid_n = _lane_tiles(N, block_n)

        x2 = jnp.transpose(x, (1, 0, 2)).reshape(I, N)
        x_p = jnp.pad(x2, ((0, K_p - I), (0, N_p - N)))

        if grid_k == 1:
            kernel = _mm_bias_kernel
            grid = (grid_o, grid_n)
            in_specs = [
                pl.BlockSpec((to, tk), lambda i, j: (i, 0)),   # weight
                pl.BlockSpec((tk, tn), lambda i, j: (0, j)),   # activations
                pl.BlockSpec((to, 1), lambda i, j: (i, 0)),    # bias column
            ]
            out_specs = pl.BlockSpec((to, tn), lambda i, j: (i, j))
            scratch = []
            semantics = ("parallel", "parallel")
        else:
            kernel = _make_mm_bias_acc_kernel(2)
            grid = (grid_o, grid_n, grid_k)
            in_specs = [
                pl.BlockSpec((to, tk), lambda i, j, k: (i, k)),
                pl.BlockSpec((tk, tn), lambda i, j, k: (k, j)),
                pl.BlockSpec((to, 1), lambda i, j, k: (i, 0)),
            ]
            out_specs = pl.BlockSpec((to, tn), lambda i, j, k: (i, j))
            scratch = [pltpu.VMEM((to, tn), jnp.float32)]
            semantics = ("parallel", "parallel", "arbitrary")

        cost = pl.CostEstimate(
            flops=2 * O_p * N_p * K_p,
            transcendentals=0,
            bytes_accessed=(
                w_p.size * itemsize * grid_n        # W re-streamed per lane tile
                + x_p.size * itemsize * grid_o      # X re-streamed per O tile
                + O_p * N_p * itemsize              # output written once
                + O_p * 4                            # bias
            ),
        )

        out2 = pl.pallas_call(
            kernel,
            out_shape=jax.ShapeDtypeStruct((O_p, N_p), out_dtype),
            grid_spec=pltpu.PrefetchScalarGridSpec(
                num_scalar_prefetch=0,
                grid=grid,
                in_specs=in_specs,
                out_specs=out_specs,
                scratch_shapes=scratch,
            ),
            compiler_params=pltpu.CompilerParams(
                dimension_semantics=semantics,
                vmem_limit_bytes=vmem_limit,
            ),
            cost_estimate=cost,
        )(w_p, x_p, b_p)

        return out2[:O, :N].reshape(O, B, L).transpose(1, 0, 2)

    # ---------- batch-gridded path: no wrapper transposes, output written in NCL layout.
    tn, L_p, grid_n = _lane_tiles(L, block_n)
    x_p = jnp.pad(x, ((0, 0), (0, K_p - I), (0, L_p - L)))

    if grid_k == 1:
        kernel = _mm_bias_kernel
        grid = (B, grid_o, grid_n)
        in_specs = [
            pl.BlockSpec((to, tk), lambda b, i, j: (i, 0)),              # weight
            pl.BlockSpec((None, tk, tn), lambda b, i, j: (b, 0, j)),     # activations
            pl.BlockSpec((to, 1), lambda b, i, j: (i, 0)),               # bias column
        ]
        out_specs = pl.BlockSpec((None, to, tn), lambda b, i, j: (b, i, j))
        scratch = []
        semantics = ("parallel", "parallel", "parallel")
    else:
        kernel = _make_mm_bias_acc_kernel(3)
        grid = (B, grid_o, grid_n, grid_k)
        in_specs = [
            pl.BlockSpec((to, tk), lambda b, i, j, k: (i, k)),
            pl.BlockSpec((None, tk, tn), lambda b, i, j, k: (b, k, j)),
            pl.BlockSpec((to, 1), lambda b, i, j, k: (i, 0)),
        ]
        out_specs = pl.BlockSpec((None, to, tn), lambda b, i, j, k: (b, i, j))
        scratch = [pltpu.VMEM((to, tn), jnp.float32)]
        semantics = ("parallel", "parallel", "parallel", "arbitrary")

    cost = pl.CostEstimate(
        flops=2 * B * O_p * L_p * K_p,
        transcendentals=0,
        bytes_accessed=(
            w_p.size * itemsize * B * grid_n     # W re-streamed per (batch, lane tile)
            + x_p.size * itemsize * grid_o       # X re-streamed per O tile
            + B * O_p * L_p * itemsize           # output written once
            + O_p * 4                             # bias
        ),
    )

    out_p = pl.pallas_call(
        kernel,
        out_shape=jax.ShapeDtypeStruct((B, O_p, L_p), out_dtype),
        grid_spec=pltpu.PrefetchScalarGridSpec(
            num_scalar_prefetch=0,
            grid=grid,
            in_specs=in_specs,
            out_specs=out_specs,
            scratch_shapes=scratch,
        ),
        compiler_params=pltpu.CompilerParams(
            dimension_semantics=semantics,
            vmem_limit_bytes=vmem_limit,
        ),
        cost_estimate=cost,
    )(w_p, x_p, b_p)

    return out_p[:, :O, :L]


if __name__ == "__main__":
    # Small shapes consistent with the module: batch=2, input_size=16, output_size=32, seq=8
    B, I, O, L = 2, 16, 32, 8

    key = jax.random.PRNGKey(0)
    kx, kw, kb = jax.random.split(key, 3)

    # PyTorch Conv1d default init: uniform(-1/sqrt(fan_in), 1/sqrt(fan_in)), fan_in = I*1
    bound = 1.0 / (I ** 0.5)
    weight = jax.random.uniform(kw, (O, I), jnp.float32, minval=-bound, maxval=bound)
    bias = jax.random.uniform(kb, (O,), jnp.float32, minval=-bound, maxval=bound)
    x = jax.random.normal(kx, (B, I, L), jnp.float32)

    # Tiny-L case -> fold path.
    out = jax.block_until_ready(embedding_forward(x, weight, bias))
    assert out.shape == (B, O, L), out.shape
    ref = jnp.einsum("oi,bil->bol", weight, x) + bias[None, :, None]
    # f32 operands / f32 accumulate; tolerance covers worst-case MXU f32-via-bf16 rounding.
    assert jnp.allclose(out, ref, atol=2e-2, rtol=2e-2), "mismatch vs f32 reference (fold path)"

    # Longer-L case -> batch-gridded (no-transpose) path.
    L2 = 256
    x2 = jax.random.normal(kx, (B, I, L2), jnp.float32)
    out2 = jax.block_until_ready(embedding_forward(x2, weight, bias))
    assert out2.shape == (B, O, L2), out2.shape
    ref2 = jnp.einsum("oi,bil->bol", weight, x2) + bias[None, :, None]
    assert jnp.allclose(out2, ref2, atol=2e-2, rtol=2e-2), "mismatch vs f32 reference (batch path)"

    print("KERNEL_OK")
</pallas_src>

<mosaic_0001>
module attributes {stable_mosaic.version = 11 : i64} {
  func.func @_mm_bias_kernel(%arg0: i32, %arg1: i32, %arg2: memref<32x16xf32, #tpu.memory_space<vmem>>, %arg3: memref<16x128xf32, #tpu.memory_space<vmem>>, %arg4: memref<32x1xf32, #tpu.memory_space<vmem>>, %arg5: memref<32x128xf32, #tpu.memory_space<vmem>>) attributes {dimension_semantics = [#tpu.dimension_semantics<parallel>, #tpu.dimension_semantics<parallel>], iteration_bounds = array<i64: 1, 1>, scalar_prefetch = 0 : i64, scratch_operands = 0 : i64, tpu.core_type = #tpu.core_type<tc>, window_params = [{transform_indices = @transform_0, window_bounds = array<i64: 32, 16>}, {transform_indices = @transform_1, window_bounds = array<i64: 16, 128>}, {transform_indices = @transform_2, window_bounds = array<i64: 32, 1>}, {transform_indices = @transform_3, window_bounds = array<i64: 32, 128>}]} {
    %c0 = arith.constant 0 : index
    %c0_0 = arith.constant 0 : index
    %0 = vector.load %arg2[%c0, %c0_0] : memref<32x16xf32, #tpu.memory_space<vmem>>, vector<32x16xf32>
    %c0_1 = arith.constant 0 : index
    %c0_2 = arith.constant 0 : index
    %1 = vector.load %arg3[%c0_1, %c0_2] : memref<16x128xf32, #tpu.memory_space<vmem>>, vector<16x128xf32>
    %cst = arith.constant dense<0.000000e+00> : vector<32x128xf32>
    %2 = tpu.matmul %0, %1, %cst {dimension_numbers = #tpu.dot_dimension_numbers<[1], [0], [0], [1], [0, 0, 1, 1], [], []>} : vector<32x16xf32>, vector<16x128xf32>, vector<32x128xf32> -> vector<32x128xf32>
    %c0_3 = arith.constant 0 : index
    %c0_4 = arith.constant 0 : index
    %3 = vector.load %arg4[%c0_3, %c0_4] : memref<32x1xf32, #tpu.memory_space<vmem>>, vector<32x1xf32>
    %4 = vector.broadcast %3 : vector<32x1xf32> to vector<32x128xf32>
    %5 = arith.addf %2, %4 : vector<32x128xf32>
    %c0_5 = arith.constant 0 : index
    %c0_6 = arith.constant 0 : index
    %6 = vector.load %arg5[%c0_5, %c0_6] : memref<32x128xf32, #tpu.memory_space<vmem>>, vector<32x128xf32>
    tpu.vector_store %arg5[%c0_5, %c0_6], %5 {strides = array<i32>} : memref<32x128xf32, #tpu.memory_space<vmem>>, vector<32x128xf32>,
    return
  }
  func.func @transform_0(%arg0: i32, %arg1: i32) -> (i32, i32) {
    %c0_i32 = arith.constant 0 : i32
    %c0_i32_0 = arith.constant 0 : i32
    return %arg0, %c0_i32 : i32, i32
  }
  func.func @transform_1(%arg0: i32, %arg1: i32) -> (i32, i32) {
    %c0_i32 = arith.constant 0 : i32
    %c0_i32_0 = arith.constant 0 : i32
    return %c0_i32, %arg1 : i32, i32
  }
  func.func @transform_2(%arg0: i32, %arg1: i32) -> (i32, i32) {
    %c0_i32 = arith.constant 0 : i32
    %c0_i32_0 = arith.constant 0 : i32
    return %arg0, %c0_i32 : i32, i32
  }
  func.func @transform_3(%arg0: i32, %arg1: i32) -> (i32, i32) {
    %c0_i32 = arith.constant 0 : i32
    return %arg0, %arg1 : i32, i32
  }
}

</mosaic_0001>

<llo_original>
// kernel: embedding_forward.1
$region0: #{embedding_forward.1}
  #allocation0 [shape = 'u32[]', space=smem, size = 0x4, offset = 0x4, fixed_abs, tag = 'smem constant byte address 0x4 - core index']
  #allocation1 [shape = 'u32[144,128]{1,0:T(1,128)}', space=vmem, size = 0x12000, scoped, tag = 'internal scratch']
  %s0 = inlined_call_operand.vmem [shape: f32[32,16], index: 0, kind: input, shape index: {}]
  %s1 = inlined_call_operand.vmem [shape: f32[16,128], index: 1, kind: input, shape index: {}]
  %s2 = inlined_call_operand.vmem [shape: f32[32,1], index: 2, kind: input, shape index: {}]
  %s3 = inlined_call_operand.vmem [shape: f32[32,128], index: 3, kind: output, shape index: {}]
  %s4 = sld [smem:[#allocation0]]
  $region22: #{embedding_forward.1} parent=0
    _
  %s6 = ssub.s32 1, %s4
  %s7 = scalar_select 0, %s6, %s4
  // Predicated region
  $region2: #{embedding_forward.1} parent=0 // pred_check
    _
  $region3: #{embedding_forward.1} parent=0 // pred_check_branch
    %9 = sbr.rel (0) target = $region5
  $region4: #{embedding_forward.1} parent=0 // pred_region
    _
  $region5: #{embedding_forward.1} parent=0 // pred_fallthru
    _
  // Predicated region
  $region6: #{embedding_forward.1} parent=0 // pred_check
    _
  $region7: #{embedding_forward.1} parent=0 // pred_check_branch
    %11 = sbr.rel (0) target = $region9
  $region8: #{embedding_forward.1} parent=0 // pred_region
    _
  $region9: #{embedding_forward.1} parent=0 // pred_fallthru
    _
  // Predicated region
  $region10: #{embedding_forward.1} parent=0 // pred_check
    _
  $region11: #{embedding_forward.1} parent=0 // pred_check_branch
    %13 = sbr.rel (0) target = $region13
  $region12: #{embedding_forward.1} parent=0 // pred_region
    _
  $region13: #{embedding_forward.1} parent=0 // pred_fallthru
    _
  %v14 = vld [vmem:[%s0] sm:$0xff]
  %v15 = vld [vmem:[%s0 + $0x8] sm:$0xff]
  %v16 = vld [vmem:[%s0 + $0x10] sm:$0xff]
  %v17 = vld [vmem:[%s0 + $0x18] sm:$0xff]
  %v18 = vld [vmem:[%s1] sm:$0xff]
  %v19 = vld [vmem:[%s1 + $0x8] sm:$0xff]
  %v20 = vld [vmem:[%s2] sm:$0xff]
  %v21 = vld [vmem:[%s2 + $0x8] sm:$0xff]
  %v22 = vld [vmem:[%s2 + $0x10] sm:$0xff]
  %v23 = vld [vmem:[%s2 + $0x18] sm:$0xff]
  %25 = vset.pattern.permute.xlu0 0
  %26 = vperm.xlu0 %25, %v20
  %v27 = vpop.permute.xlu0 %26
  %30 = vset.pattern.permute.xlu0 0
  %31 = vperm.xlu0 %30, %v21
  %v32 = vpop.permute.xlu0 %31
  %35 = vset.pattern.permute.xlu0 0
  %36 = vperm.xlu0 %35, %v22
  %v37 = vpop.permute.xlu0 %36
  %40 = vset.pattern.permute.xlu0 0
  %41 = vperm.xlu0 %40, %v23
  %v42 = vpop.permute.xlu0 %41
  %vm44 = vcmask 130048
  %v46 = vsel %vm44, %v14, 0
  %v49 = vsel %vm44, %v15, 0
  %v52 = vsel %vm44, %v16, 0
  %v55 = vsel %vm44, %v17, 0
  %57 = vmatprep.subr.mxu0 0.0
  %58 = vmatpush1.msra.mxu0 %v18
  %59 = vmatprep.subr.mxu0 0.0
  %60 = vmatpush1.msra.mxu0 %v19
  %61 = vmatprep.subr.mxu0 0.0
  %62 = vmatpush1.msra.mxu0 0.0
  %63 = vmatprep.subr.mxu0 0.0
  %64 = vmatpush1.msra.mxu0 0.0
  %65 = vmatprep.subr.mxu0 0.0
  %66 = vmatpush1.msra.mxu0 0.0
  %67 = vmatprep.subr.mxu0 0.0
  %68 = vmatpush1.msra.mxu0 0.0
  %69 = vmatprep.subr.mxu0 0.0
  %70 = vmatpush1.msra.mxu0 0.0
  %71 = vmatprep.subr.mxu0 0.0
  %72 = vmatpush1.msra.mxu0 0.0
  %73 = vmatprep.subr.mxu0 0.0
  %74 = vmatpush1.msra.mxu0 0.0
  %75 = vmatprep.subr.mxu0 0.0
  %76 = vmatpush1.msra.mxu0 0.0
  %77 = vmatprep.subr.mxu0 0.0
  %78 = vmatpush1.msra.mxu0 0.0
  %79 = vmatprep.subr.mxu0 0.0
  %80 = vmatpush1.msra.mxu0 0.0
  %81 = vmatprep.subr.mxu0 0.0
  %82 = vmatpush1.msra.mxu0 0.0
  %83 = vmatprep.subr.mxu0 0.0
  %84 = vmatpush1.msra.mxu0 0.0
  %85 = vmatprep.subr.mxu0 0.0
  %86 = vmatpush1.msra.mxu0 0.0
  %87 = vmatprep.subr.mxu0 0.0
  %88 = vmatpush1.msra.mxu0 0.0
  %89 = vmatprep.subr.mxu0 0.0
  %90 = vmatpush1.msra.mxu0 0.0
  %91 = vmatprep.subr.mxu0 0.0
  %92 = vmatpush1.msra.mxu0 0.0
  %93 = vmatprep.subr.mxu0 0.0
  %94 = vmatpush1.msra.mxu0 0.0
  %95 = vmatprep.subr.mxu0 0.0
  %96 = vmatpush1.msra.mxu0 0.0
  %97 = vmatprep.subr.mxu0 0.0
  %98 = vmatpush1.msra.mxu0 0.0
  %99 = vmatprep.subr.mxu0 0.0
  %100 = vmatpush1.msra.mxu0 0.0
  %101 = vmatprep.subr.mxu0 0.0
  %102 = vmatpush1.msra.mxu0 0.0
  %103 = vmatprep.subr.mxu0 0.0
  %104 = vmatpush1.msra.mxu0 0.0
  %105 = vmatprep.subr.mxu0 0.0
  %106 = vmatpush1.msra.mxu0 0.0
  %107 = vmatprep.subr.mxu0 0.0
  %108 = vmatpush1.msra.mxu0 0.0
  %109 = vmatprep.subr.mxu0 0.0
  %110 = vmatpush1.msra.mxu0 0.0
  %111 = vmatprep.subr.mxu0 0.0
  %112 = vmatpush1.msra.mxu0 0.0
  %113 = vmatprep.subr.mxu0 0.0
  %114 = vmatpush1.msra.mxu0 0.0
  %115 = vmatprep.subr.mxu0 0.0
  %116 = vmatpush1.msra.mxu0 0.0
  %117 = vmatprep.subr.mxu0 0.0
  %118 = vmatpush1.msra.mxu0 0.0
  %119 = vmatprep.subr.mxu0 0.0
  %120 = vmatpush1.msra.mxu0 0.0
  %121 = vmatprep.mubr.f32.mxu0 0.0
  %122 = vmatmul.mubr.f32.gmra.mrb[0].mxu0 %v46
  %v123 = vpop.f32.mrb[0].mxu0
  %v124 = vadd.f32 %v27, %v123
  %v125 = vpop.f32.mrb[0].mxu0
  %126 = vmatprep.mubr.f32.mxu0 0.0
  %127 = vmatmul.mubr.f32.gmra.mrb[0].mxu0 %v49
  %v128 = vpop.f32.mrb[0].mxu0
  %v129 = vadd.f32 %v32, %v128
  %v130 = vpop.f32.mrb[0].mxu0
  %131 = vmatprep.mubr.f32.mxu0 0.0
  %132 = vmatmul.mubr.f32.gmra.mrb[0].mxu0 %v52
  %v133 = vpop.f32.mrb[0].mxu0
  %v134 = vadd.f32 %v37, %v133
  %v135 = vpop.f32.mrb[0].mxu0
  %136 = vmatprep.mubr.f32.mxu0 0.0
  %137 = vmatmul.mubr.f32.gmra.mrb[0].mxu0 %v55
  %v138 = vpop.f32.mrb[0].mxu0
  %v139 = vadd.f32 %v42, %v138
  %v140 = vpop.f32.mrb[0].mxu0
  %141 = vdwg.mxu0
  %142 = vst [vmem:[%s3] sm:$0xff] %v124
  %143 = vst [vmem:[%s3 + $0x8] sm:$0xff] %v129
  %144 = vst [vmem:[%s3 + $0x10] sm:$0xff] %v134
  %145 = vst [vmem:[%s3 + $0x18] sm:$0xff] %v139
  // Predicated region
  $region14: #{embedding_forward.1} parent=0 // pred_check
    _
  $region15: #{embedding_forward.1} parent=0 // pred_check_branch
    %147 = sbr.rel (0) target = $region17
  $region16: #{embedding_forward.1} parent=0 // pred_region
    _
  $region17: #{embedding_forward.1} parent=0 // pred_fallthru
    _
  // Predicated region
  $region18: #{embedding_forward.1} parent=0 // pred_check
    _
  $region19: #{embedding_forward.1} parent=0 // pred_check_branch
    %149 = sbr.rel (0) target = $region21
  $region20: #{embedding_forward.1} parent=0 // pred_region
    _
  $region21: #{embedding_forward.1} parent=0 // pred_fallthru
    _

</llo_original>
